<compile_context>
chip_gen: v7x
topology: tpu7x:2x2x1
jax: 0.10.0
libtpu: 0.0.40
codegen_flags: <defaults>
</compile_context>

<pallas_src>
import jax
import jax.numpy as jnp
from jax.experimental import pallas as pl
from jax.experimental.pallas import tpu as pltpu

_LANE = 128  # feature dims padded to multiples of the 128-wide lane axis


def _round_up(n, k):
    return ((n + k - 1) // k) * k


def _sublane_multiple(dtype):
    # f32 -> 8, bf16 -> 16, int8/fp8 -> 32 (packed sublane tiling)
    return max(8, 32 // jnp.dtype(dtype).itemsize)


def _pad2d(a, rows, cols):
    r, c = a.shape
    if r == rows and c == cols:
        return a
    return jnp.pad(a, ((0, rows - r), (0, cols - c)))


def _vmem_capacity_bytes():
    try:
        return int(pltpu.get_tpu_info().vmem_capacity_bytes)
    except Exception:  # pragma: no cover - fallback if query unavailable
        return 64 << 20  # conservative: v7x physical VMEM


def _derive_tb(avail_bytes, per_row_bytes, batch, sub):
    """Largest legal batch tile that fits `avail_bytes` (None if none fits)."""
    tb = int(avail_bytes // max(per_row_bytes, 1))
    tb = min(tb, 2048)
    if tb >= batch:
        return batch          # single block covering the full batch (always legal)
    if tb < sub:
        return None
    return (tb // sub) * sub


# -----------------------------------------------------------------------------
# Parameter preparation (hoisted out of the per-call path)
# -----------------------------------------------------------------------------
def prepare_comm_params(w1, b1, w2, b2):
    """Pad encoder/decoder params to lane-aligned shapes ONCE (model-load time).

    w1: (n_in, m), b1: (m,) or (1, m), w2: (m, n_out), b2: (n_out,) or (1, n_out).
    Biases are pre-cast to f32 so the kernel epilogue has no per-step casts.
    """
    n_in, m = w1.shape
    m2, n_out = w2.shape
    assert m == m2, "encoder latent dim (a.m) must match decoder input dim (b.m)"
    n_in_p = _round_up(n_in, _LANE)
    m_p = _round_up(m, _LANE)
    n_out_p = _round_up(n_out, _LANE)
    return {
        "w1": _pad2d(w1, n_in_p, m_p),
        "b1": _pad2d(b1.reshape(1, -1).astype(jnp.float32), 1, m_p),
        "w2": _pad2d(w2, m_p, n_out_p),
        "b2": _pad2d(b2.reshape(1, -1).astype(jnp.float32), 1, n_out_p),
        "n_in": n_in, "m": m, "n_out": n_out,
    }


# -----------------------------------------------------------------------------
# Kernels
# -----------------------------------------------------------------------------
def comm_kernel(x_ref, w1_ref, b1_ref, w2_ref, b2_ref, o_ref):
    """Weights fully VMEM-resident: one batch tile -> one output tile."""
    # encoder: Linear + ReLU (f32 accumulation on the MXU; biases already f32)
    h = jnp.dot(x_ref[...], w1_ref[...], preferred_element_type=jnp.float32)
    h = jnp.maximum(h + b1_ref[...], 0.0)
    # decoder: cast latent to the weight dtype so bf16 weights keep the second
    # matmul at native bf16 MXU throughput (still accumulates in f32).
    y = jnp.dot(h.astype(w2_ref.dtype), w2_ref[...],
                preferred_element_type=jnp.float32)
    o_ref[...] = (y + b2_ref[...]).astype(o_ref.dtype)


def comm_kernel_ktiled(x_ref, w1_ref, b1_ref, w2_ref, b2_ref, o_ref, acc_ref):
    """Latent-dim (m) tiled: grid = (batch_tiles, m_tiles); exact because ReLU
    is elementwise over m, so relu(x@w1+b1)@w2 == sum_k relu(x@w1_k+b1_k)@w2_k."""
    k = pl.program_id(1)

    @pl.when(k == 0)
    def _():
        acc_ref[...] = jnp.zeros_like(acc_ref)

    h = jnp.dot(x_ref[...], w1_ref[...], preferred_element_type=jnp.float32)
    h = jnp.maximum(h + b1_ref[...], 0.0)
    acc_ref[...] += jnp.dot(h.astype(w2_ref.dtype), w2_ref[...],
                            preferred_element_type=jnp.float32)

    @pl.when(k == pl.num_programs(1) - 1)
    def _():
        o_ref[...] = (acc_ref[...] + b2_ref[...]).astype(o_ref.dtype)


# -----------------------------------------------------------------------------
# Tiling plans
# -----------------------------------------------------------------------------
def _plan_ktile(batch, n_in_p, m_p, n_out_p, xbytes, wbytes, sub, budget,
                tk=None, tb=None):
    """Pick (batch_tile, latent_tile) for the K-tiled path. None if nothing fits."""
    if tk is not None:
        tk = min(m_p, max(_LANE, (int(tk) // _LANE) * _LANE))
        tk_opts = [tk]
    else:
        tk_opts = sorted({min(m_p, c * _LANE) for c in (32, 16, 8, 4, 2, 1)},
                         reverse=True)
    target_tb = min(batch, 512)
    best = None
    for tk_c in tk_opts:
        # double-buffered streamed w1/b1/w2 chunks + resident f32 b2 (x2 bufs)
        w_chunk = 2 * ((n_in_p + n_out_p) * tk_c * wbytes + tk_c * 4) + 2 * n_out_p * 4
        avail = budget - w_chunk
        if avail <= 0:
            continue
        per_row = (2 * (n_in_p + n_out_p) * xbytes   # streamed x / out tiles (x2)
                   + n_out_p * 4                      # f32 accumulator
                   + tk_c * (4 + wbytes))             # h (f32) + h cast
        if tb is not None:
            if tb * per_row <= avail:
                return tb, tk_c
            continue
        tb_c = _derive_tb(avail, per_row, batch, sub)
        if tb_c is None:
            continue
        if tb_c >= target_tb:
            return tb_c, tk_c
        if best is None or tb_c > best[0]:
            best = (tb_c, tk_c)
    return best


# -----------------------------------------------------------------------------
# Forward
# -----------------------------------------------------------------------------
def comm_forward(x, params, *, block_b=None, latent_tile=None):
    """Fused encoder->decoder forward.  x: (B, n_in); params from
    prepare_comm_params().  block_b / latent_tile override the derived tiling."""
    B, n_in = x.shape
    assert n_in == params["n_in"]
    w1_p, b1_p, w2_p, b2_p = params["w1"], params["b1"], params["w2"], params["b2"]
    n_in_p, m_p = w1_p.shape
    n_out_p = w2_p.shape[1]
    n_out = params["n_out"]

    dtype = x.dtype
    xbytes = jnp.dtype(dtype).itemsize
    wbytes = jnp.dtype(w1_p.dtype).itemsize
    sub = _sublane_multiple(dtype)

    # Zero-pad only the contracted feature dim of x (needed for correctness of
    # the dot); the batch dim is NOT padded -- Pallas masks the ragged block.
    if n_in != n_in_p:
        x = jnp.pad(x, ((0, 0), (0, n_in_p - n_in)))

    vmem_cap = _vmem_capacity_bytes()
    vmem_limit = int(min(vmem_cap * 3 // 4, 100 << 20))  # 96 MiB v5e/v6e, 48 MiB v7x
    budget = vmem_limit - (2 << 20)                      # Mosaic internal scratch

    # user-forced batch tile
    tb_user = None
    if block_b is not None:
        tb_user = B if int(block_b) >= B else max(sub, (int(block_b) // sub) * sub)

    # ---- resident-weight path feasibility (budgeted against granted VMEM) ----
    w_res = 2 * (n_in_p * m_p + m_p * n_out_p) * wbytes + 2 * (m_p + n_out_p) * 4
    per_row = (2 * (n_in_p + n_out_p) * xbytes          # streamed x / out (x2 bufs)
               + m_p * (4 + wbytes) + n_out_p * 4)      # h f32, h cast, y f32
    tb_simple = None
    if latent_tile is None:
        avail = budget - w_res
        if tb_user is not None:
            if avail >= tb_user * per_row:
                tb_simple = tb_user
        else:
            tb_simple = _derive_tb(avail, per_row, B, sub)
            # v6e/v7x MXUs want >=256-row tiles; if weights crowd the tile out
            # that far, switch to the K-tiled path instead.
            if tb_simple is not None and tb_simple < min(B, 256):
                tb_simple = None

    flops = int(2 * B * (n_in_p * m_p + m_p * n_out_p))

    if tb_simple is not None:
        tb = tb_simple
        n_blocks = pl.cdiv(B, tb)
        bytes_acc = int(B * (n_in_p + n_out_p) * xbytes
                        + (n_in_p * m_p + m_p * n_out_p) * wbytes
                        + (m_p + n_out_p) * 4)
        ce = pl.CostEstimate(flops=flops, transcendentals=0,
                             bytes_accessed=bytes_acc)

        def _call(single_buffer_weights):
            wkw = ({"pipeline_mode": pl.Buffered(1)}
                   if single_buffer_weights else {})
            return pl.pallas_call(
                comm_kernel,
                out_shape=jax.ShapeDtypeStruct((B, n_out_p), dtype),
                grid=(n_blocks,),
                in_specs=[
                    pl.BlockSpec((tb, n_in_p), lambda i: (i, 0)),        # x streamed
                    pl.BlockSpec((n_in_p, m_p), lambda i: (0, 0), **wkw),  # w1 resident
                    pl.BlockSpec((1, m_p), lambda i: (0, 0), **wkw),       # b1 resident
                    pl.BlockSpec((m_p, n_out_p), lambda i: (0, 0), **wkw), # w2 resident
                    pl.BlockSpec((1, n_out_p), lambda i: (0, 0), **wkw),   # b2 resident
                ],
                out_specs=pl.BlockSpec((tb, n_out_p), lambda i: (i, 0)),
                compiler_params=pltpu.CompilerParams(
                    dimension_semantics=("parallel",),
                    vmem_limit_bytes=vmem_limit,
                ),
                cost_estimate=ce,
            )(x, w1_p, b1_p, w2_p, b2_p)

        try:
            out = _call(True)    # single-buffer the resident weights (halves VMEM)
        except Exception:
            out = _call(False)   # fallback if pipeline_mode=Buffered(1) unsupported
    else:
        # ---- K-tiled path over the latent dim (large / v7x-sized weights) ----
        plan = _plan_ktile(B, n_in_p, m_p, n_out_p, xbytes, wbytes, sub, budget,
                           tk=latent_tile, tb=tb_user)
        if plan is None:
            raise ValueError(
                "Comm kernel: weights too large for VMEM even with latent-dim "
                "tiling; reduce block_b / latent_tile or shard the layer.")
        tb, tk = plan
        n_blocks = pl.cdiv(B, tb)
        n_k = pl.cdiv(m_p, tk)
        bytes_acc = int(B * (n_in_p + n_out_p) * xbytes
                        + n_blocks * (n_in_p * m_p + m_p * n_out_p) * wbytes
                        + (m_p + n_out_p) * 4)
        ce = pl.CostEstimate(flops=flops, transcendentals=0,
                             bytes_accessed=bytes_acc)
        out = pl.pallas_call(
            comm_kernel_ktiled,
            out_shape=jax.ShapeDtypeStruct((B, n_out_p), dtype),
            grid=(n_blocks, n_k),                         # reduction axis last
            in_specs=[
                pl.BlockSpec((tb, n_in_p), lambda i, k: (i, 0)),   # x: fixed over k
                pl.BlockSpec((n_in_p, tk), lambda i, k: (0, k)),   # w1 cols streamed
                pl.BlockSpec((1, tk), lambda i, k: (0, k)),        # b1 chunk
                pl.BlockSpec((tk, n_out_p), lambda i, k: (k, 0)),  # w2 rows streamed
                pl.BlockSpec((1, n_out_p), lambda i, k: (0, 0)),   # b2 resident
            ],
            out_specs=pl.BlockSpec((tb, n_out_p), lambda i, k: (i, 0)),
            scratch_shapes=[pltpu.VMEM((tb, n_out_p), jnp.float32)],
            compiler_params=pltpu.CompilerParams(
                dimension_semantics=("parallel", "arbitrary"),
                vmem_limit_bytes=vmem_limit,
            ),
            cost_estimate=ce,
        )(x, w1_p, b1_p, w2_p, b2_p)

    if n_out != n_out_p:
        out = out[:, :n_out]   # only the feature dim was padded; batch is exact
    return out


def reference_forward(x, w1, b1, w2, b2):
    h = jnp.maximum(x @ w1 + b1.reshape(1, -1), 0.0)
    return h @ w2 + b2.reshape(1, -1)


if __name__ == "__main__":
    key = jax.random.PRNGKey(0)
    kx, k1, kb1, k2, kb2 = jax.random.split(key, 5)

    batch, n_in, m_lat, n_out = 8, 32, 16, 32
    x = jax.random.normal(kx, (batch, n_in), dtype=jnp.float32)
    w1 = jax.random.normal(k1, (n_in, m_lat), dtype=jnp.float32) * 0.1
    b1 = jax.random.normal(kb1, (1, m_lat), dtype=jnp.float32) * 0.1
    w2 = jax.random.normal(k2, (m_lat, n_out), dtype=jnp.float32) * 0.1
    b2 = jax.random.normal(kb2, (1, n_out), dtype=jnp.float32) * 0.1

    # 1) f32, single block, weights VMEM-resident.
    params = prepare_comm_params(w1, b1, w2, b2)
    out = jax.block_until_ready(comm_forward(x, params))
    ref = reference_forward(x, w1, b1, w2, b2)
    assert out.shape == (batch, n_out)
    assert jnp.allclose(out, ref, atol=1e-5, rtol=1e-5)

    # 2) bf16 params/activations, ragged batch (56 rows / 32-row tiles):
    #    streamed x+out tiles vs resident weights, last block masked by Pallas
    #    (no wrapper-side batch padding, no batch output slice), h cast to bf16
    #    before the decoder matmul (native bf16 MXU throughput).
    Bb = 56
    xb = jax.random.normal(kx, (Bb, n_in), dtype=jnp.float32)
    params16 = prepare_comm_params(w1.astype(jnp.bfloat16), b1.astype(jnp.bfloat16),
                                   w2.astype(jnp.bfloat16), b2.astype(jnp.bfloat16))
    outb = jax.block_until_ready(
        comm_forward(xb.astype(jnp.bfloat16), params16, block_b=32))
    refb = reference_forward(
        xb.astype(jnp.bfloat16).astype(jnp.float32),
        w1.astype(jnp.bfloat16).astype(jnp.float32),
        b1.astype(jnp.bfloat16).astype(jnp.float32),
        w2.astype(jnp.bfloat16).astype(jnp.float32),
        b2.astype(jnp.bfloat16).astype(jnp.float32))
    assert outb.shape == (Bb, n_out)
    assert jnp.allclose(outb.astype(jnp.float32), refb, atol=3e-2, rtol=3e-2)

    # 3) Forced latent-dim (K) tiling: exercises the v7x large-weight fallback
    #    (f32 accumulator + pl.when init/finalize across the "arbitrary" axis).
    k3 = jax.random.split(key, 9)
    B3, n_in3, m3, n_out3 = 16, 64, 200, 48
    x3 = jax.random.normal(k3[0], (B3, n_in3), dtype=jnp.float32)
    w13 = jax.random.normal(k3[1], (n_in3, m3), dtype=jnp.float32) * 0.1
    b13 = jax.random.normal(k3[2], (m3,), dtype=jnp.float32) * 0.1
    w23 = jax.random.normal(k3[3], (m3, n_out3), dtype=jnp.float32) * 0.1
    b23 = jax.random.normal(k3[4], (n_out3,), dtype=jnp.float32) * 0.1
    params3 = prepare_comm_params(w13, b13, w23, b23)
    out3 = jax.block_until_ready(comm_forward(x3, params3, latent_tile=128))
    ref3 = reference_forward(x3, w13, b13, w23, b23)
    assert out3.shape == (B3, n_out3)
    assert jnp.allclose(out3, ref3, atol=1e-4, rtol=1e-4)

    print("KERNEL_OK")
</pallas_src>

<mosaic_0001>
module attributes {stable_mosaic.version = 11 : i64} {
  func.func @comm_kernel(%arg0: i32, %arg1: memref<8x128xf32, #tpu.memory_space<vmem>>, %arg2: memref<128x128xf32, #tpu.memory_space<vmem>>, %arg3: memref<1x128xf32, #tpu.memory_space<vmem>>, %arg4: memref<128x128xf32, #tpu.memory_space<vmem>>, %arg5: memref<1x128xf32, #tpu.memory_space<vmem>>, %arg6: memref<8x128xf32, #tpu.memory_space<vmem>>) attributes {dimension_semantics = [#tpu.dimension_semantics<parallel>], iteration_bounds = array<i64: 1>, scalar_prefetch = 0 : i64, scratch_operands = 0 : i64, tpu.core_type = #tpu.core_type<tc>, window_params = [{transform_indices = @transform_0, window_bounds = array<i64: 8, 128>}, {pipeline_mode = #tpu.pipeline_mode<synchronous>, transform_indices = @transform_1, window_bounds = array<i64: 128, 128>}, {pipeline_mode = #tpu.pipeline_mode<synchronous>, transform_indices = @transform_2, window_bounds = array<i64: 1, 128>}, {pipeline_mode = #tpu.pipeline_mode<synchronous>, transform_indices = @transform_3, window_bounds = array<i64: 128, 128>}, {pipeline_mode = #tpu.pipeline_mode<synchronous>, transform_indices = @transform_4, window_bounds = array<i64: 1, 128>}, {transform_indices = @transform_5, window_bounds = array<i64: 8, 128>}]} {
    %c0 = arith.constant 0 : index
    %c0_0 = arith.constant 0 : index
    %0 = vector.load %arg1[%c0, %c0_0] : memref<8x128xf32, #tpu.memory_space<vmem>>, vector<8x128xf32>
    %c0_1 = arith.constant 0 : index
    %c0_2 = arith.constant 0 : index
    %1 = vector.load %arg2[%c0_1, %c0_2] : memref<128x128xf32, #tpu.memory_space<vmem>>, vector<128x128xf32>
    %cst = arith.constant dense<0.000000e+00> : vector<8x128xf32>
    %2 = tpu.matmul %0, %1, %cst {dimension_numbers = #tpu.dot_dimension_numbers<[1], [0], [0], [1], [0, 0, 1, 1], [], []>} : vector<8x128xf32>, vector<128x128xf32>, vector<8x128xf32> -> vector<8x128xf32>
    %c0_3 = arith.constant 0 : index
    %c0_4 = arith.constant 0 : index
    %3 = vector.load %arg3[%c0_3, %c0_4] : memref<1x128xf32, #tpu.memory_space<vmem>>, vector<1x128xf32>
    %4 = vector.broadcast %3 : vector<1x128xf32> to vector<8x128xf32>
    %5 = arith.addf %2, %4 : vector<8x128xf32>
    %cst_5 = arith.constant 0.000000e+00 : f32
    %6 = vector.broadcast %cst_5 : f32 to vector<8x128xf32>
    %7 = arith.maximumf %5, %6 : vector<8x128xf32>
    %c0_6 = arith.constant 0 : index
    %c0_7 = arith.constant 0 : index
    %8 = vector.load %arg4[%c0_6, %c0_7] : memref<128x128xf32, #tpu.memory_space<vmem>>, vector<128x128xf32>
    %cst_8 = arith.constant dense<0.000000e+00> : vector<8x128xf32>
    %9 = tpu.matmul %7, %8, %cst_8 {dimension_numbers = #tpu.dot_dimension_numbers<[1], [0], [0], [1], [0, 0, 1, 1], [], []>} : vector<8x128xf32>, vector<128x128xf32>, vector<8x128xf32> -> vector<8x128xf32>
    %c0_9 = arith.constant 0 : index
    %c0_10 = arith.constant 0 : index
    %10 = vector.load %arg5[%c0_9, %c0_10] : memref<1x128xf32, #tpu.memory_space<vmem>>, vector<1x128xf32>
    %11 = vector.broadcast %10 : vector<1x128xf32> to vector<8x128xf32>
    %12 = arith.addf %9, %11 : vector<8x128xf32>
    %c0_11 = arith.constant 0 : index
    %c0_12 = arith.constant 0 : index
    %13 = vector.load %arg6[%c0_11, %c0_12] : memref<8x128xf32, #tpu.memory_space<vmem>>, vector<8x128xf32>
    tpu.vector_store %arg6[%c0_11, %c0_12], %12 {strides = array<i32>} : memref<8x128xf32, #tpu.memory_space<vmem>>, vector<8x128xf32>,
    return
  }
  func.func @transform_0(%arg0: i32) -> (i32, i32) {
    %c0_i32 = arith.constant 0 : i32
    %c0_i32_0 = arith.constant 0 : i32
    return %arg0, %c0_i32 : i32, i32
  }
  func.func @transform_1(%arg0: i32) -> (i32, i32) {
    %c0_i32 = arith.constant 0 : i32
    %c0_i32_0 = arith.constant 0 : i32
    %c0_i32_1 = arith.constant 0 : i32
    return %c0_i32, %c0_i32_0 : i32, i32
  }
  func.func @transform_2(%arg0: i32) -> (i32, i32) {
    %c0_i32 = arith.constant 0 : i32
    %c0_i32_0 = arith.constant 0 : i32
    %c0_i32_1 = arith.constant 0 : i32
    return %c0_i32, %c0_i32_0 : i32, i32
  }
  func.func @transform_3(%arg0: i32) -> (i32, i32) {
    %c0_i32 = arith.constant 0 : i32
    %c0_i32_0 = arith.constant 0 : i32
    %c0_i32_1 = arith.constant 0 : i32
    return %c0_i32, %c0_i32_0 : i32, i32
  }
  func.func @transform_4(%arg0: i32) -> (i32, i32) {
    %c0_i32 = arith.constant 0 : i32
    %c0_i32_0 = arith.constant 0 : i32
    %c0_i32_1 = arith.constant 0 : i32
    return %c0_i32, %c0_i32_0 : i32, i32
  }
  func.func @transform_5(%arg0: i32) -> (i32, i32) {
    %c0_i32 = arith.constant 0 : i32
    %c0_i32_0 = arith.constant 0 : i32
    return %arg0, %c0_i32 : i32, i32
  }
}

module attributes {stable_mosaic.version = 11 : i64} {
  func.func @comm_kernel(%arg0: i32, %arg1: memref<8x128xf32, #tpu.memory_space<vmem>>, %arg2: memref<128x128xf32, #tpu.memory_space<vmem>>, %arg3: memref<1x128xf32, #tpu.memory_space<vmem>>, %arg4: memref<128x128xf32, #tpu.memory_space<vmem>>, %arg5: memref<1x128xf32, #tpu.memory_space<vmem>>, %arg6: memref<8x128xf32, #tpu.memory_space<vmem>>) attributes {dimension_semantics = [#tpu.dimension_semantics<parallel>], iteration_bounds = array<i64: 1>, scalar_prefetch = 0 : i64, scratch_operands = 0 : i64, tpu.core_type = #tpu.core_type<tc>, window_params = [{transform_indices = @transform_0, window_bounds = array<i64: 8, 128>}, {pipeline_mode = #tpu.pipeline_mode<synchronous>, transform_indices = @transform_1, window_bounds = array<i64: 128, 128>}, {pipeline_mode = #tpu.pipeline_mode<synchronous>, transform_indices = @transform_2, window_bounds = array<i64: 1, 128>}, {pipeline_mode = #tpu.pipeline_mode<synchronous>, transform_indices = @transform_3, window_bounds = array<i64: 128, 128>}, {pipeline_mode = #tpu.pipeline_mode<synchronous>, transform_indices = @transform_4, window_bounds = array<i64: 1, 128>}, {transform_indices = @transform_5, window_bounds = array<i64: 8, 128>}]} {
    %c0 = arith.constant 0 : index
    %c0_0 = arith.constant 0 : index
    %0 = vector.load %arg1[%c0, %c0_0] : memref<8x128xf32, #tpu.memory_space<vmem>>, vector<8x128xf32>
    %c0_1 = arith.constant 0 : index
    %c0_2 = arith.constant 0 : index
    %1 = vector.load %arg2[%c0_1, %c0_2] : memref<128x128xf32, #tpu.memory_space<vmem>>, vector<128x128xf32>
    %cst = arith.constant dense<0.000000e+00> : vector<8x128xf32>
    %2 = tpu.matmul %0, %1, %cst {dimension_numbers = #tpu.dot_dimension_numbers<[1], [0], [0], [1], [0, 0, 1, 1], [], []>} : vector<8x128xf32>, vector<128x128xf32>, vector<8x128xf32> -> vector<8x128xf32>
    %c0_3 = arith.constant 0 : index
    %c0_4 = arith.constant 0 : index
    %3 = vector.load %arg3[%c0_3, %c0_4] : memref<1x128xf32, #tpu.memory_space<vmem>>, vector<1x128xf32>
    %4 = vector.broadcast %3 : vector<1x128xf32> to vector<8x128xf32>
    %5 = arith.addf %2, %4 : vector<8x128xf32>
    %cst_5 = arith.constant 0.000000e+00 : f32
    %6 = vector.broadcast %cst_5 : f32 to vector<8x128xf32>
    %7 = arith.maximumf %5, %6 : vector<8x128xf32>
    %c0_6 = arith.constant 0 : index
    %c0_7 = arith.constant 0 : index
    %8 = vector.load %arg4[%c0_6, %c0_7] : memref<128x128xf32, #tpu.memory_space<vmem>>, vector<128x128xf32>
    %cst_8 = arith.constant dense<0.000000e+00> : vector<8x128xf32>
    %9 = tpu.matmul %7, %8, %cst_8 {dimension_numbers = #tpu.dot_dimension_numbers<[1], [0], [0], [1], [0, 0, 1, 1], [], []>} : vector<8x128xf32>, vector<128x128xf32>, vector<8x128xf32> -> vector<8x128xf32>
    %c0_9 = arith.constant 0 : index
    %c0_10 = arith.constant 0 : index
    %10 = vector.load %arg5[%c0_9, %c0_10] : memref<1x128xf32, #tpu.memory_space<vmem>>, vector<1x128xf32>
    %11 = vector.broadcast %10 : vector<1x128xf32> to vector<8x128xf32>
    %12 = arith.addf %9, %11 : vector<8x128xf32>
    %c0_11 = arith.constant 0 : index
    %c0_12 = arith.constant 0 : index
    %13 = vector.load %arg6[%c0_11, %c0_12] : memref<8x128xf32, #tpu.memory_space<vmem>>, vector<8x128xf32>
    tpu.vector_store %arg6[%c0_11, %c0_12], %12 {strides = array<i32>} : memref<8x128xf32, #tpu.memory_space<vmem>>, vector<8x128xf32>,
    return
  }
  func.func @transform_0(%arg0: i32) -> (i32, i32) {
    %c0_i32 = arith.constant 0 : i32
    %c0_i32_0 = arith.constant 0 : i32
    return %arg0, %c0_i32 : i32, i32
  }
  func.func @transform_1(%arg0: i32) -> (i32, i32) {
    %c0_i32 = arith.constant 0 : i32
    %c0_i32_0 = arith.constant 0 : i32
    %c0_i32_1 = arith.constant 0 : i32
    return %c0_i32, %c0_i32_0 : i32, i32
  }
  func.func @transform_2(%arg0: i32) -> (i32, i32) {
    %c0_i32 = arith.constant 0 : i32
    %c0_i32_0 = arith.constant 0 : i32
    %c0_i32_1 = arith.constant 0 : i32
    return %c0_i32, %c0_i32_0 : i32, i32
  }
  func.func @transform_3(%arg0: i32) -> (i32, i32) {
    %c0_i32 = arith.constant 0 : i32
    %c0_i32_0 = arith.constant 0 : i32
    %c0_i32_1 = arith.constant 0 : i32
    return %c0_i32, %c0_i32_0 : i32, i32
  }
  func.func @transform_4(%arg0: i32) -> (i32, i32) {
    %c0_i32 = arith.constant 0 : i32
    %c0_i32_0 = arith.constant 0 : i32
    %c0_i32_1 = arith.constant 0 : i32
    return %c0_i32, %c0_i32_0 : i32, i32
  }
  func.func @transform_5(%arg0: i32) -> (i32, i32) {
    %c0_i32 = arith.constant 0 : i32
    %c0_i32_0 = arith.constant 0 : i32
    return %arg0, %c0_i32 : i32, i32
  }
}

</mosaic_0001>

<llo_original>
// kernel: tpu_custom_call.1
$region0: #{tpu_custom_call.1}
  #allocation0 [shape = 'u32[]', space=smem, size = 0x4, offset = 0x4, fixed_abs, tag = 'smem constant byte address 0x4 - core index']
  #allocation1 [shape = 'u32[144,128]{1,0:T(1,128)}', space=vmem, size = 0x12000, scoped, tag = 'internal scratch']
  %s0 = inlined_call_operand.hbm [shape: f32[8,128], index: 0, kind: input, shape index: {}]
  %s1 = inlined_call_operand.hbm [shape: f32[128,128], index: 1, kind: input, shape index: {}]
  %s2 = inlined_call_operand.vmem [shape: f32[1,128], index: 2, kind: input, shape index: {}]
  %s3 = inlined_call_operand.hbm [shape: f32[128,128], index: 3, kind: input, shape index: {}]
  %s4 = inlined_call_operand.vmem [shape: f32[1,128], index: 4, kind: input, shape index: {}]
  %s5 = inlined_call_operand.hbm [shape: f32[8,128], index: 5, kind: output, shape index: {}]
  %s6 = sld [smem:[#allocation0]]
  $region42: #{tpu_custom_call.1} parent=0
    _
  %s8 = ssub.s32 1, %s6
  %s9 = scalar_select 0, %s8, %s6
  $region1: #{tpu_custom_call.1} parent=0
    #allocation2 [shape = 'u8[4096]{0}', space=vmem, size = 0x1000, scoped, tag = 'input window, operand 0, single buffered']
    #allocation3 [shape = 's32[1]{0}', space=sflag, size = 0x4, scoped, tag = 'scoped memory for tpu_custom_call.1']
    #allocation4 [shape = 's32[1]{0}', space=sflag, size = 0x4, scoped, tag = 'scoped memory for tpu_custom_call.1']
    #allocation5 [shape = 'u8[65536]{0}', space=vmem, size = 0x10000, scoped, tag = 'input window, operand 1, single buffered']
    #allocation6 [shape = 's32[1]{0}', space=sflag, size = 0x4, scoped, tag = 'scoped memory for tpu_custom_call.1']
    #allocation7 [shape = 'u8[65536]{0}', space=vmem, size = 0x10000, scoped, tag = 'input window, operand 3, single buffered']
    #allocation8 [shape = 'u8[4096]{0}', space=vmem, size = 0x1000, scoped, tag = 'output window, operand 0, single buffered']
    %10 = vsyncpa [#allocation3], 0
    %11 = vsyncpa [#allocation6], 0
    %12 = vsyncpa [#allocation4], 0
    // Predicated region
    $region2: #{tpu_custom_call.1} parent=1 // pred_check
      _
    $region3: #{tpu_custom_call.1} parent=1 // pred_check_branch
      %14 = sbr.rel (0) target = $region5
    $region4: #{tpu_custom_call.1} parent=1 // pred_region
      %s16 = ssub.s32 128, 128
      %17 = vsyncadd [#allocation3], %s16
      %s19 = sshll.u32 [#allocation2], 4
      %s20 = int_to_ptr.vmem [resolvable:$true] %s19
      %22 = dma.hbm_to_vmem [thread:$0]  %s0, 128, %s20, [#allocation3]
    $region5: #{tpu_custom_call.1} parent=1 // pred_fallthru
      _
    // Predicated region
    $region6: #{tpu_custom_call.1} parent=1 // pred_check
      _
    $region7: #{tpu_custom_call.1} parent=1 // pred_check_branch
      %24 = sbr.rel (0) target = $region9
    $region8: #{tpu_custom_call.1} parent=1 // pred_region
      %s26 = ssub.s32 2048, 2048
      %27 = vsyncadd [#allocation6], %s26
      %s28 = sshll.u32 [#allocation5], 4
      %s29 = int_to_ptr.vmem [resolvable:$true] %s28
      %34 = dma.hbm_to_vmem [thread:$0]  %s1, 2048, %s29, [#allocation6], 128, 128, 8
    $region9: #{tpu_custom_call.1} parent=1 // pred_fallthru
      _
    // Predicated region
    $region10: #{tpu_custom_call.1} parent=1 // pred_check
      _
    $region11: #{tpu_custom_call.1} parent=1 // pred_check_branch
      %36 = sbr.rel (0) target = $region13
    $region12: #{tpu_custom_call.1} parent=1 // pred_region
      _
    $region13: #{tpu_custom_call.1} parent=1 // pred_fallthru
      _
    // Predicated region
    $region14: #{tpu_custom_call.1} parent=1 // pred_check
      _
    $region15: #{tpu_custom_call.1} parent=1 // pred_check_branch
      %38 = sbr.rel (0) target = $region17
    $region16: #{tpu_custom_call.1} parent=1 // pred_region
      %s40 = ssub.s32 2048, 2048
      %41 = vsyncadd [#allocation6], %s40
      %s42 = sshll.u32 [#allocation7], 4
      %s43 = int_to_ptr.vmem [resolvable:$true] %s42
      %48 = dma.hbm_to_vmem [thread:$0]  %s3, 2048, %s43, [#allocation6], 128, 128, 8
    $region17: #{tpu_custom_call.1} parent=1 // pred_fallthru
      _
    // Predicated region
    $region18: #{tpu_custom_call.1} parent=1 // pred_check
      _
    $region19: #{tpu_custom_call.1} parent=1 // pred_check_branch
      %50 = sbr.rel (0) target = $region21
    $region20: #{tpu_custom_call.1} parent=1 // pred_region
      _
    $region21: #{tpu_custom_call.1} parent=1 // pred_fallthru
      _
    // Predicated region
    $region22: #{tpu_custom_call.1} parent=1 // pred_check
      _
    $region23: #{tpu_custom_call.1} parent=1 // pred_check_branch
      %52 = sbr.rel (0) target = $region25
    $region24: #{tpu_custom_call.1} parent=1 // pred_region
      %53 = dma.done [#allocation3], 128
    $region25: #{tpu_custom_call.1} parent=1 // pred_fallthru
      _
    // Predicated region
    $region26: #{tpu_custom_call.1} parent=1 // pred_check
      _
    $region27: #{tpu_custom_call.1} parent=1 // pred_check_branch
      %55 = sbr.rel (0) target = $region29
    $region28: #{tpu_custom_call.1} parent=1 // pred_region
      %56 = dma.done [#allocation6], 2048
    $region29: #{tpu_custom_call.1} parent=1 // pred_fallthru
      _
    // Predicated region
    $region30: #{tpu_custom_call.1} parent=1 // pred_check
      _
    $region31: #{tpu_custom_call.1} parent=1 // pred_check_branch
      %58 = sbr.rel (0) target = $region33
    $region32: #{tpu_custom_call.1} parent=1 // pred_region
      %59 = dma.done [#allocation6], 2048
    $region33: #{tpu_custom_call.1} parent=1 // pred_fallthru
      _
    %v60 = vld [vmem:[#allocation2] sm:$0xff]
    %v61 = vld [vmem:[#allocation5] sm:$0xff]
    %v62 = vld [vmem:[#allocation5 + $0x8] sm:$0xff]
    %v63 = vld [vmem:[#allocation5 + $0x10] sm:$0xff]
    %v64 = vld [vmem:[#allocation5 + $0x18] sm:$0xff]
    %v65 = vld [vmem:[#allocation5 + $0x20] sm:$0xff]
    %v66 = vld [vmem:[#allocation5 + $0x28] sm:$0xff]
    %v67 = vld [vmem:[#allocation5 + $0x30] sm:$0xff]
    %v68 = vld [vmem:[#allocation5 + $0x38] sm:$0xff]
    %v69 = vld [vmem:[#allocation5 + $0x40] sm:$0xff]
    %v70 = vld [vmem:[#allocation5 + $0x48] sm:$0xff]
    %v71 = vld [vmem:[#allocation5 + $0x50] sm:$0xff]
    %v72 = vld [vmem:[#allocation5 + $0x58] sm:$0xff]
    %v73 = vld [vmem:[#allocation5 + $0x60] sm:$0xff]
    %v74 = vld [vmem:[#allocation5 + $0x68] sm:$0xff]
    %v75 = vld [vmem:[#allocation5 + $0x70] sm:$0xff]
    %v76 = vld [vmem:[#allocation5 + $0x78] sm:$0xff]
    %v77 = vld [vmem:[%s2] sm:$0x1]
    %v79 = vlaneseq
    %v80 = vshrl.u32 %v79, 7
    %v81 = vsub.s32 0, %v80
    %v82 = vrot.slane %v77, %v81
    %84 = vmatprep.subr.mxu0 0.0
    %85 = vmatpush1.msra.mxu0 %v61
    %86 = vmatprep.subr.mxu0 0.0
    %87 = vmatpush1.msra.mxu0 %v62
    %88 = vmatprep.subr.mxu0 0.0
    %89 = vmatpush1.msra.mxu0 %v63
    %90 = vmatprep.subr.mxu0 0.0
    %91 = vmatpush1.msra.mxu0 %v64
    %92 = vmatprep.subr.mxu0 0.0
    %93 = vmatpush1.msra.mxu0 %v65
    %94 = vmatprep.subr.mxu0 0.0
    %95 = vmatpush1.msra.mxu0 %v66
    %96 = vmatprep.subr.mxu0 0.0
    %97 = vmatpush1.msra.mxu0 %v67
    %98 = vmatprep.subr.mxu0 0.0
    %99 = vmatpush1.msra.mxu0 %v68
    %100 = vmatprep.subr.mxu0 0.0
    %101 = vmatpush1.msra.mxu0 %v69
    %102 = vmatprep.subr.mxu0 0.0
    %103 = vmatpush1.msra.mxu0 %v70
    %104 = vmatprep.subr.mxu0 0.0
    %105 = vmatpush1.msra.mxu0 %v71
    %106 = vmatprep.subr.mxu0 0.0
    %107 = vmatpush1.msra.mxu0 %v72
    %108 = vmatprep.subr.mxu0 0.0
    %109 = vmatpush1.msra.mxu0 %v73
    %110 = vmatprep.subr.mxu0 0.0
    %111 = vmatpush1.msra.mxu0 %v74
    %112 = vmatprep.subr.mxu0 0.0
    %113 = vmatpush1.msra.mxu0 %v75
    %114 = vmatprep.subr.mxu0 0.0
    %115 = vmatpush1.msra.mxu0 %v76
    %116 = vmatprep.subr.mxu0 0.0
    %117 = vmatpush1.msra.mxu0 0.0
    %118 = vmatprep.subr.mxu0 0.0
    %119 = vmatpush1.msra.mxu0 0.0
    %120 = vmatprep.subr.mxu0 0.0
    %121 = vmatpush1.msra.mxu0 0.0
    %122 = vmatprep.subr.mxu0 0.0
    %123 = vmatpush1.msra.mxu0 0.0
    %124 = vmatprep.subr.mxu0 0.0
    %125 = vmatpush1.msra.mxu0 0.0
    %126 = vmatprep.subr.mxu0 0.0
    %127 = vmatpush1.msra.mxu0 0.0
    %128 = vmatprep.subr.mxu0 0.0
    %129 = vmatpush1.msra.mxu0 0.0
    %130 = vmatprep.subr.mxu0 0.0
    %131 = vmatpush1.msra.mxu0 0.0
    %132 = vmatprep.subr.mxu0 0.0
    %133 = vmatpush1.msra.mxu0 0.0
    %134 = vmatprep.subr.mxu0 0.0
    %135 = vmatpush1.msra.mxu0 0.0
    %136 = vmatprep.subr.mxu0 0.0
    %137 = vmatpush1.msra.mxu0 0.0
    %138 = vmatprep.subr.mxu0 0.0
    %139 = vmatpush1.msra.mxu0 0.0
    %140 = vmatprep.subr.mxu0 0.0
    %141 = vmatpush1.msra.mxu0 0.0
    %142 = vmatprep.subr.mxu0 0.0
    %143 = vmatpush1.msra.mxu0 0.0
    %144 = vmatprep.subr.mxu0 0.0
    %145 = vmatpush1.msra.mxu0 0.0
    %146 = vmatprep.subr.mxu0 0.0
    %147 = vmatpush1.msra.mxu0 0.0
    %148 = vmatprep.mubr.f32.mxu0 0.0
    %149 = vmatmul.mubr.f32.gmra.mrb[0].mxu0 %v60
    %v150 = vpop.f32.mrb[0].mxu0
    %v151 = vadd.f32 %v82, %v150
    %v152 = vpop.f32.mrb[0].mxu0
    %153 = vdwg.mxu0
    %v154 = vmax.f32 %v151, 0.0
    %v155 = vld [vmem:[#allocation7] sm:$0xff]
    %v156 = vld [vmem:[#allocation7 + $0x8] sm:$0xff]
    %v157 = vld [vmem:[#allocation7 + $0x10] sm:$0xff]
    %v158 = vld [vmem:[#allocation7 + $0x18] sm:$0xff]
    %v159 = vld [vmem:[#allocation7 + $0x20] sm:$0xff]
    %v160 = vld [vmem:[#allocation7 + $0x28] sm:$0xff]
    %v161 = vld [vmem:[#allocation7 + $0x30] sm:$0xff]
    %v162 = vld [vmem:[#allocation7 + $0x38] sm:$0xff]
    %v163 = vld [vmem:[#allocation7 + $0x40] sm:$0xff]
    %v164 = vld [vmem:[#allocation7 + $0x48] sm:$0xff]
    %v165 = vld [vmem:[#allocation7 + $0x50] sm:$0xff]
    %v166 = vld [vmem:[#allocation7 + $0x58] sm:$0xff]
    %v167 = vld [vmem:[#allocation7 + $0x60] sm:$0xff]
    %v168 = vld [vmem:[#allocation7 + $0x68] sm:$0xff]
    %v169 = vld [vmem:[#allocation7 + $0x70] sm:$0xff]
    %v170 = vld [vmem:[#allocation7 + $0x78] sm:$0xff]
    %v171 = vld [vmem:[%s4] sm:$0x1]
    %v173 = vlaneseq
    %v174 = vshrl.u32 %v173, 7
    %v175 = vsub.s32 0, %v174
    %v176 = vrot.slane %v171, %v175
    %178 = vmatprep.subr.mxu0 0.0
    %179 = vmatpush1.msra.mxu0 %v155
    %180 = vmatprep.subr.mxu0 0.0
    %181 = vmatpush1.msra.mxu0 %v156
    %182 = vmatprep.subr.mxu0 0.0
    %183 = vmatpush1.msra.mxu0 %v157
    %184 = vmatprep.subr.mxu0 0.0
    %185 = vmatpush1.msra.mxu0 %v158
    %186 = vmatprep.subr.mxu0 0.0
    %187 = vmatpush1.msra.mxu0 %v159
    %188 = vmatprep.subr.mxu0 0.0
    %189 = vmatpush1.msra.mxu0 %v160
    %190 = vmatprep.subr.mxu0 0.0
    %191 = vmatpush1.msra.mxu0 %v161
    %192 = vmatprep.subr.mxu0 0.0
    %193 = vmatpush1.msra.mxu0 %v162
    %194 = vmatprep.subr.mxu0 0.0
    %195 = vmatpush1.msra.mxu0 %v163
    %196 = vmatprep.subr.mxu0 0.0
    %197 = vmatpush1.msra.mxu0 %v164
    %198 = vmatprep.subr.mxu0 0.0
    %199 = vmatpush1.msra.mxu0 %v165
    %200 = vmatprep.subr.mxu0 0.0
    %201 = vmatpush1.msra.mxu0 %v166
    %202 = vmatprep.subr.mxu0 0.0
    %203 = vmatpush1.msra.mxu0 %v167
    %204 = vmatprep.subr.mxu0 0.0
    %205 = vmatpush1.msra.mxu0 %v168
    %206 = vmatprep.subr.mxu0 0.0
    %207 = vmatpush1.msra.mxu0 %v169
    %208 = vmatprep.subr.mxu0 0.0
    %209 = vmatpush1.msra.mxu0 %v170
    %210 = vmatprep.subr.mxu0 0.0
    %211 = vmatpush1.msra.mxu0 0.0
    %212 = vmatprep.subr.mxu0 0.0
    %213 = vmatpush1.msra.mxu0 0.0
    %214 = vmatprep.subr.mxu0 0.0
    %215 = vmatpush1.msra.mxu0 0.0
    %216 = vmatprep.subr.mxu0 0.0
    %217 = vmatpush1.msra.mxu0 0.0
    %218 = vmatprep.subr.mxu0 0.0
    %219 = vmatpush1.msra.mxu0 0.0
    %220 = vmatprep.subr.mxu0 0.0
    %221 = vmatpush1.msra.mxu0 0.0
    %222 = vmatprep.subr.mxu0 0.0
    %223 = vmatpush1.msra.mxu0 0.0
    %224 = vmatprep.subr.mxu0 0.0
    %225 = vmatpush1.msra.mxu0 0.0
    %226 = vmatprep.subr.mxu0 0.0
    %227 = vmatpush1.msra.mxu0 0.0
    %228 = vmatprep.subr.mxu0 0.0
    %229 = vmatpush1.msra.mxu0 0.0
    %230 = vmatprep.subr.mxu0 0.0
    %231 = vmatpush1.msra.mxu0 0.0
    %232 = vmatprep.subr.mxu0 0.0
    %233 = vmatpush1.msra.mxu0 0.0
    %234 = vmatprep.subr.mxu0 0.0
    %235 = vmatpush1.msra.mxu0 0.0
    %236 = vmatprep.subr.mxu0 0.0
    %237 = vmatpush1.msra.mxu0 0.0
    %238 = vmatprep.subr.mxu0 0.0
    %239 = vmatpush1.msra.mxu0 0.0
    %240 = vmatprep.subr.mxu0 0.0
    %241 = vmatpush1.msra.mxu0 0.0
    %242 = vmatprep.mubr.f32.mxu0 0.0
    %243 = vmatmul.mubr.f32.gmra.mrb[0].mxu0 %v154
    %v244 = vpop.f32.mrb[0].mxu0
    %v245 = vadd.f32 %v176, %v244
    %v246 = vpop.f32.mrb[0].mxu0
    %247 = vdwg.mxu0
    %248 = vst [vmem:[#allocation8] sm:$0xff] %v245
    // Predicated region
    $region34: #{tpu_custom_call.1} parent=1 // pred_check
      _
    $region35: #{tpu_custom_call.1} parent=1 // pred_check_branch
      %250 = sbr.rel (0) target = $region37
    $region36: #{tpu_custom_call.1} parent=1 // pred_region
      %s252 = ssub.s32 128, 128
      %253 = vsyncadd [#allocation4], %s252
      %s255 = sshll.u32 [#allocation8], 4
      %s256 = int_to_ptr.vmem [resolvable:$true] %s255
      %258 = dma.vmem_to_hbm [thread:$0]  %s256, 128, %s5, [#allocation4]
    $region37: #{tpu_custom_call.1} parent=1 // pred_fallthru
      _
    // Predicated region
    $region38: #{tpu_custom_call.1} parent=1 // pred_check
      _
    $region39: #{tpu_custom_call.1} parent=1 // pred_check_branch
      %260 = sbr.rel (0) target = $region41
    $region40: #{tpu_custom_call.1} parent=1 // pred_region
      %261 = dma.done [#allocation4], 128
    $region41: #{tpu_custom_call.1} parent=1 // pred_fallthru
      _
    %262 = vsyncpa [#allocation3], 1
    %263 = vsyncpa [#allocation6], 1
    %264 = vsyncpa [#allocation4], 1

// kernel: tpu_custom_call.1
$region0: #{tpu_custom_call.1}
  #allocation0 [shape = 'u32[]', space=smem, size = 0x4, offset = 0x4, fixed_abs, tag = 'smem constant byte address 0x4 - core index']
  #allocation1 [shape = 'u32[144,128]{1,0:T(1,128)}', space=vmem, size = 0x12000, scoped, tag = 'internal scratch']
  %s0 = inlined_call_operand.hbm [shape: f32[8,128], index: 0, kind: input, shape index: {}]
  %s1 = inlined_call_operand.hbm [shape: f32[128,128], index: 1, kind: input, shape index: {}]
  %s2 = inlined_call_operand.vmem [shape: f32[1,128], index: 2, kind: input, shape index: {}]
  %s3 = inlined_call_operand.hbm [shape: f32[128,128], index: 3, kind: input, shape index: {}]
  %s4 = inlined_call_operand.vmem [shape: f32[1,128], index: 4, kind: input, shape index: {}]
  %s5 = inlined_call_operand.hbm [shape: f32[8,128], index: 5, kind: output, shape index: {}]
  %s6 = sld [smem:[#allocation0]]
  $region42: #{tpu_custom_call.1} parent=0
    _
  %s8 = ssub.s32 1, %s6
  %s9 = scalar_select 0, %s8, %s6
  $region1: #{tpu_custom_call.1} parent=0
    #allocation2 [shape = 'u8[4096]{0}', space=vmem, size = 0x1000, scoped, tag = 'input window, operand 0, single buffered']
    #allocation3 [shape = 's32[1]{0}', space=sflag, size = 0x4, scoped, tag = 'scoped memory for tpu_custom_call.1']
    #allocation4 [shape = 's32[1]{0}', space=sflag, size = 0x4, scoped, tag = 'scoped memory for tpu_custom_call.1']
    #allocation5 [shape = 'u8[65536]{0}', space=vmem, size = 0x10000, scoped, tag = 'input window, operand 1, single buffered']
    #allocation6 [shape = 's32[1]{0}', space=sflag, size = 0x4, scoped, tag = 'scoped memory for tpu_custom_call.1']
    #allocation7 [shape = 'u8[65536]{0}', space=vmem, size = 0x10000, scoped, tag = 'input window, operand 3, single buffered']
    #allocation8 [shape = 'u8[4096]{0}', space=vmem, size = 0x1000, scoped, tag = 'output window, operand 0, single buffered']
    %10 = vsyncpa [#allocation3], 0
    %11 = vsyncpa [#allocation6], 0
    %12 = vsyncpa [#allocation4], 0
    // Predicated region
    $region2: #{tpu_custom_call.1} parent=1 // pred_check
      _
    $region3: #{tpu_custom_call.1} parent=1 // pred_check_branch
      %14 = sbr.rel (0) target = $region5
    $region4: #{tpu_custom_call.1} parent=1 // pred_region
      %s16 = ssub.s32 128, 128
      %17 = vsyncadd [#allocation3], %s16
      %s19 = sshll.u32 [#allocation2], 4
      %s20 = int_to_ptr.vmem [resolvable:$true] %s19
      %22 = dma.hbm_to_vmem [thread:$0]  %s0, 128, %s20, [#allocation3]
    $region5: #{tpu_custom_call.1} parent=1 // pred_fallthru
      _
    // Predicated region
    $region6: #{tpu_custom_call.1} parent=1 // pred_check
      _
    $region7: #{tpu_custom_call.1} parent=1 // pred_check_branch
      %24 = sbr.rel (0) target = $region9
    $region8: #{tpu_custom_call.1} parent=1 // pred_region
      %s26 = ssub.s32 2048, 2048
      %27 = vsyncadd [#allocation6], %s26
      %s28 = sshll.u32 [#allocation5], 4
      %s29 = int_to_ptr.vmem [resolvable:$true] %s28
      %34 = dma.hbm_to_vmem [thread:$0]  %s1, 2048, %s29, [#allocation6], 128, 128, 8
    $region9: #{tpu_custom_call.1} parent=1 // pred_fallthru
      _
    // Predicated region
    $region10: #{tpu_custom_call.1} parent=1 // pred_check
      _
    $region11: #{tpu_custom_call.1} parent=1 // pred_check_branch
      %36 = sbr.rel (0) target = $region13
    $region12: #{tpu_custom_call.1} parent=1 // pred_region
      _
    $region13: #{tpu_custom_call.1} parent=1 // pred_fallthru
      _
    // Predicated region
    $region14: #{tpu_custom_call.1} parent=1 // pred_check
      _
    $region15: #{tpu_custom_call.1} parent=1 // pred_check_branch
      %38 = sbr.rel (0) target = $region17
    $region16: #{tpu_custom_call.1} parent=1 // pred_region
      %s40 = ssub.s32 2048, 2048
      %41 = vsyncadd [#allocation6], %s40
      %s42 = sshll.u32 [#allocation7], 4
      %s43 = int_to_ptr.vmem [resolvable:$true] %s42
      %48 = dma.hbm_to_vmem [thread:$0]  %s3, 2048, %s43, [#allocation6], 128, 128, 8
    $region17: #{tpu_custom_call.1} parent=1 // pred_fallthru
      _
    // Predicated region
    $region18: #{tpu_custom_call.1} parent=1 // pred_check
      _
    $region19: #{tpu_custom_call.1} parent=1 // pred_check_branch
      %50 = sbr.rel (0) target = $region21
    $region20: #{tpu_custom_call.1} parent=1 // pred_region
      _
    $region21: #{tpu_custom_call.1} parent=1 // pred_fallthru
      _
    // Predicated region
    $region22: #{tpu_custom_call.1} parent=1 // pred_check
      _
    $region23: #{tpu_custom_call.1} parent=1 // pred_check_branch
      %52 = sbr.rel (0) target = $region25
    $region24: #{tpu_custom_call.1} parent=1 // pred_region
      %53 = dma.done [#allocation3], 128
    $region25: #{tpu_custom_call.1} parent=1 // pred_fallthru
      _
    // Predicated region
    $region26: #{tpu_custom_call.1} parent=1 // pred_check
      _
    $region27: #{tpu_custom_call.1} parent=1 // pred_check_branch
      %55 = sbr.rel (0) target = $region29
    $region28: #{tpu_custom_call.1} parent=1 // pred_region
      %56 = dma.done [#allocation6], 2048
    $region29: #{tpu_custom_call.1} parent=1 // pred_fallthru
      _
    // Predicated region
    $region30: #{tpu_custom_call.1} parent=1 // pred_check
      _
    $region31: #{tpu_custom_call.1} parent=1 // pred_check_branch
      %58 = sbr.rel (0) target = $region33
    $region32: #{tpu_custom_call.1} parent=1 // pred_region
      %59 = dma.done [#allocation6], 2048
    $region33: #{tpu_custom_call.1} parent=1 // pred_fallthru
      _
    %v60 = vld [vmem:[#allocation2] sm:$0xff]
    %v61 = vld [vmem:[#allocation5] sm:$0xff]
    %v62 = vld [vmem:[#allocation5 + $0x8] sm:$0xff]
    %v63 = vld [vmem:[#allocation5 + $0x10] sm:$0xff]
    %v64 = vld [vmem:[#allocation5 + $0x18] sm:$0xff]
    %v65 = vld [vmem:[#allocation5 + $0x20] sm:$0xff]
    %v66 = vld [vmem:[#allocation5 + $0x28] sm:$0xff]
    %v67 = vld [vmem:[#allocation5 + $0x30] sm:$0xff]
    %v68 = vld [vmem:[#allocation5 + $0x38] sm:$0xff]
    %v69 = vld [vmem:[#allocation5 + $0x40] sm:$0xff]
    %v70 = vld [vmem:[#allocation5 + $0x48] sm:$0xff]
    %v71 = vld [vmem:[#allocation5 + $0x50] sm:$0xff]
    %v72 = vld [vmem:[#allocation5 + $0x58] sm:$0xff]
    %v73 = vld [vmem:[#allocation5 + $0x60] sm:$0xff]
    %v74 = vld [vmem:[#allocation5 + $0x68] sm:$0xff]
    %v75 = vld [vmem:[#allocation5 + $0x70] sm:$0xff]
    %v76 = vld [vmem:[#allocation5 + $0x78] sm:$0xff]
    %v77 = vld [vmem:[%s2] sm:$0x1]
    %v79 = vlaneseq
    %v80 = vshrl.u32 %v79, 7
    %v81 = vsub.s32 0, %v80
    %v82 = vrot.slane %v77, %v81
    %84 = vmatprep.subr.mxu0 0.0
    %85 = vmatpush1.msra.mxu0 %v61
    %86 = vmatprep.subr.mxu0 0.0
    %87 = vmatpush1.msra.mxu0 %v62
    %88 = vmatprep.subr.mxu0 0.0
    %89 = vmatpush1.msra.mxu0 %v63
    %90 = vmatprep.subr.mxu0 0.0
    %91 = vmatpush1.msra.mxu0 %v64
    %92 = vmatprep.subr.mxu0 0.0
    %93 = vmatpush1.msra.mxu0 %v65
    %94 = vmatprep.subr.mxu0 0.0
    %95 = vmatpush1.msra.mxu0 %v66
    %96 = vmatprep.subr.mxu0 0.0
    %97 = vmatpush1.msra.mxu0 %v67
    %98 = vmatprep.subr.mxu0 0.0
    %99 = vmatpush1.msra.mxu0 %v68
    %100 = vmatprep.subr.mxu0 0.0
    %101 = vmatpush1.msra.mxu0 %v69
    %102 = vmatprep.subr.mxu0 0.0
    %103 = vmatpush1.msra.mxu0 %v70
    %104 = vmatprep.subr.mxu0 0.0
    %105 = vmatpush1.msra.mxu0 %v71
    %106 = vmatprep.subr.mxu0 0.0
    %107 = vmatpush1.msra.mxu0 %v72
    %108 = vmatprep.subr.mxu0 0.0
    %109 = vmatpush1.msra.mxu0 %v73
    %110 = vmatprep.subr.mxu0 0.0
    %111 = vmatpush1.msra.mxu0 %v74
    %112 = vmatprep.subr.mxu0 0.0
    %113 = vmatpush1.msra.mxu0 %v75
    %114 = vmatprep.subr.mxu0 0.0
    %115 = vmatpush1.msra.mxu0 %v76
    %116 = vmatprep.subr.mxu0 0.0
    %117 = vmatpush1.msra.mxu0 0.0
    %118 = vmatprep.subr.mxu0 0.0
    %119 = vmatpush1.msra.mxu0 0.0
    %120 = vmatprep.subr.mxu0 0.0
    %121 = vmatpush1.msra.mxu0 0.0
    %122 = vmatprep.subr.mxu0 0.0
    %123 = vmatpush1.msra.mxu0 0.0
    %124 = vmatprep.subr.mxu0 0.0
    %125 = vmatpush1.msra.mxu0 0.0
    %126 = vmatprep.subr.mxu0 0.0
    %127 = vmatpush1.msra.mxu0 0.0
    %128 = vmatprep.subr.mxu0 0.0
    %129 = vmatpush1.msra.mxu0 0.0
    %130 = vmatprep.subr.mxu0 0.0
    %131 = vmatpush1.msra.mxu0 0.0
    %132 = vmatprep.subr.mxu0 0.0
    %133 = vmatpush1.msra.mxu0 0.0
    %134 = vmatprep.subr.mxu0 0.0
    %135 = vmatpush1.msra.mxu0 0.0
    %136 = vmatprep.subr.mxu0 0.0
    %137 = vmatpush1.msra.mxu0 0.0
    %138 = vmatprep.subr.mxu0 0.0
    %139 = vmatpush1.msra.mxu0 0.0
    %140 = vmatprep.subr.mxu0 0.0
    %141 = vmatpush1.msra.mxu0 0.0
    %142 = vmatprep.subr.mxu0 0.0
    %143 = vmatpush1.msra.mxu0 0.0
    %144 = vmatprep.subr.mxu0 0.0
    %145 = vmatpush1.msra.mxu0 0.0
    %146 = vmatprep.subr.mxu0 0.0
    %147 = vmatpush1.msra.mxu0 0.0
    %148 = vmatprep.mubr.f32.mxu0 0.0
    %149 = vmatmul.mubr.f32.gmra.mrb[0].mxu0 %v60
    %v150 = vpop.f32.mrb[0].mxu0
    %v151 = vadd.f32 %v82, %v150
    %v152 = vpop.f32.mrb[0].mxu0
    %153 = vdwg.mxu0
    %v154 = vmax.f32 %v151, 0.0
    %v155 = vld [vmem:[#allocation7] sm:$0xff]
    %v156 = vld [vmem:[#allocation7 + $0x8] sm:$0xff]
    %v157 = vld [vmem:[#allocation7 + $0x10] sm:$0xff]
    %v158 = vld [vmem:[#allocation7 + $0x18] sm:$0xff]
    %v159 = vld [vmem:[#allocation7 + $0x20] sm:$0xff]
    %v160 = vld [vmem:[#allocation7 + $0x28] sm:$0xff]
    %v161 = vld [vmem:[#allocation7 + $0x30] sm:$0xff]
    %v162 = vld [vmem:[#allocation7 + $0x38] sm:$0xff]
    %v163 = vld [vmem:[#allocation7 + $0x40] sm:$0xff]
    %v164 = vld [vmem:[#allocation7 + $0x48] sm:$0xff]
    %v165 = vld [vmem:[#allocation7 + $0x50] sm:$0xff]
    %v166 = vld [vmem:[#allocation7 + $0x58] sm:$0xff]
    %v167 = vld [vmem:[#allocation7 + $0x60] sm:$0xff]
    %v168 = vld [vmem:[#allocation7 + $0x68] sm:$0xff]
    %v169 = vld [vmem:[#allocation7 + $0x70] sm:$0xff]
    %v170 = vld [vmem:[#allocation7 + $0x78] sm:$0xff]
    %v171 = vld [vmem:[%s4] sm:$0x1]
    %v173 = vlaneseq
    %v174 = vshrl.u32 %v173, 7
    %v175 = vsub.s32 0, %v174
    %v176 = vrot.slane %v171, %v175
    %178 = vmatprep.subr.mxu0 0.0
    %179 = vmatpush1.msra.mxu0 %v155
    %180 = vmatprep.subr.mxu0 0.0
    %181 = vmatpush1.msra.mxu0 %v156
    %182 = vmatprep.subr.mxu0 0.0
    %183 = vmatpush1.msra.mxu0 %v157
    %184 = vmatprep.subr.mxu0 0.0
    %185 = vmatpush1.msra.mxu0 %v158
    %186 = vmatprep.subr.mxu0 0.0
    %187 = vmatpush1.msra.mxu0 %v159
    %188 = vmatprep.subr.mxu0 0.0
    %189 = vmatpush1.msra.mxu0 %v160
    %190 = vmatprep.subr.mxu0 0.0
    %191 = vmatpush1.msra.mxu0 %v161
    %192 = vmatprep.subr.mxu0 0.0
    %193 = vmatpush1.msra.mxu0 %v162
    %194 = vmatprep.subr.mxu0 0.0
    %195 = vmatpush1.msra.mxu0 %v163
    %196 = vmatprep.subr.mxu0 0.0
    %197 = vmatpush1.msra.mxu0 %v164
    %198 = vmatprep.subr.mxu0 0.0
    %199 = vmatpush1.msra.mxu0 %v165
    %200 = vmatprep.subr.mxu0 0.0
    %201 = vmatpush1.msra.mxu0 %v166
    %202 = vmatprep.subr.mxu0 0.0
    %203 = vmatpush1.msra.mxu0 %v167
    %204 = vmatprep.subr.mxu0 0.0
    %205 = vmatpush1.msra.mxu0 %v168
    %206 = vmatprep.subr.mxu0 0.0
    %207 = vmatpush1.msra.mxu0 %v169
    %208 = vmatprep.subr.mxu0 0.0
    %209 = vmatpush1.msra.mxu0 %v170
    %210 = vmatprep.subr.mxu0 0.0
    %211 = vmatpush1.msra.mxu0 0.0
    %212 = vmatprep.subr.mxu0 0.0
    %213 = vmatpush1.msra.mxu0 0.0
    %214 = vmatprep.subr.mxu0 0.0
    %215 = vmatpush1.msra.mxu0 0.0
    %216 = vmatprep.subr.mxu0 0.0
    %217 = vmatpush1.msra.mxu0 0.0
    %218 = vmatprep.subr.mxu0 0.0
    %219 = vmatpush1.msra.mxu0 0.0
    %220 = vmatprep.subr.mxu0 0.0
    %221 = vmatpush1.msra.mxu0 0.0
    %222 = vmatprep.subr.mxu0 0.0
    %223 = vmatpush1.msra.mxu0 0.0
    %224 = vmatprep.subr.mxu0 0.0
    %225 = vmatpush1.msra.mxu0 0.0
    %226 = vmatprep.subr.mxu0 0.0
    %227 = vmatpush1.msra.mxu0 0.0
    %228 = vmatprep.subr.mxu0 0.0
    %229 = vmatpush1.msra.mxu0 0.0
    %230 = vmatprep.subr.mxu0 0.0
    %231 = vmatpush1.msra.mxu0 0.0
    %232 = vmatprep.subr.mxu0 0.0
    %233 = vmatpush1.msra.mxu0 0.0
    %234 = vmatprep.subr.mxu0 0.0
    %235 = vmatpush1.msra.mxu0 0.0
    %236 = vmatprep.subr.mxu0 0.0
    %237 = vmatpush1.msra.mxu0 0.0
    %238 = vmatprep.subr.mxu0 0.0
    %239 = vmatpush1.msra.mxu0 0.0
    %240 = vmatprep.subr.mxu0 0.0
    %241 = vmatpush1.msra.mxu0 0.0
    %242 = vmatprep.mubr.f32.mxu0 0.0
    %243 = vmatmul.mubr.f32.gmra.mrb[0].mxu0 %v154
    %v244 = vpop.f32.mrb[0].mxu0
    %v245 = vadd.f32 %v176, %v244
    %v246 = vpop.f32.mrb[0].mxu0
    %247 = vdwg.mxu0
    %248 = vst [vmem:[#allocation8] sm:$0xff] %v245
    // Predicated region
    $region34: #{tpu_custom_call.1} parent=1 // pred_check
      _
    $region35: #{tpu_custom_call.1} parent=1 // pred_check_branch
      %250 = sbr.rel (0) target = $region37
    $region36: #{tpu_custom_call.1} parent=1 // pred_region
      %s252 = ssub.s32 128, 128
      %253 = vsyncadd [#allocation4], %s252
      %s255 = sshll.u32 [#allocation8], 4
      %s256 = int_to_ptr.vmem [resolvable:$true] %s255
      %258 = dma.vmem_to_hbm [thread:$0]  %s256, 128, %s5, [#allocation4]
    $region37: #{tpu_custom_call.1} parent=1 // pred_fallthru
      _
    // Predicated region
    $region38: #{tpu_custom_call.1} parent=1 // pred_check
      _
    $region39: #{tpu_custom_call.1} parent=1 // pred_check_branch
      %260 = sbr.rel (0) target = $region41
    $region40: #{tpu_custom_call.1} parent=1 // pred_region
      %261 = dma.done [#allocation4], 128
    $region41: #{tpu_custom_call.1} parent=1 // pred_fallthru
      _
    %262 = vsyncpa [#allocation3], 1
    %263 = vsyncpa [#allocation6], 1
    %264 = vsyncpa [#allocation4], 1

</llo_original>
